<compile_context>
chip_gen: v7x
topology: tpu7x:2x2x1
jax: 0.10.0
libtpu: 0.0.40
codegen_flags: <defaults>
</compile_context>

<pallas_src>
import jax
import jax.numpy as jnp
from jax.experimental import pallas as pl
from jax.experimental.pallas import tpu as pltpu


def _qnet_kernel(x_ref, w1_ref, b1_ref, w2_ref, b2_ref, out_ref):
    # Hidden layer: (B, S) @ (S, H) on the MXU with f32 accumulation,
    # bias-add + ReLU on the VPU in f32.
    x = x_ref[...]
    h = jnp.dot(x, w1_ref[...], preferred_element_type=jnp.float32)
    h = jnp.maximum(h + b1_ref[...], 0.0)
    # Output layer: (B, H) @ (H, A) + bias, f32 accumulate, unpadded store.
    a = jnp.dot(h, w2_ref[...], preferred_element_type=jnp.float32)
    out_ref[...] = (a + b2_ref[...]).astype(out_ref.dtype)


def init_params(key, state_dim, hidden_dim, action_dim):
    """Deterministic init mimicking torch.nn.Linear default (uniform +/- 1/sqrt(fan_in))."""
    k1, k2, k3, k4 = jax.random.split(key, 4)
    bound1 = 1.0 / jnp.sqrt(state_dim)
    bound2 = 1.0 / jnp.sqrt(hidden_dim)
    # Stored as (in, out) so the kernel does x @ W directly (same math as torch x @ W^T).
    w1 = jax.random.uniform(k1, (state_dim, hidden_dim), jnp.float32, -bound1, bound1)
    b1 = jax.random.uniform(k2, (1, hidden_dim), jnp.float32, -bound1, bound1)
    w2 = jax.random.uniform(k3, (hidden_dim, action_dim), jnp.float32, -bound2, bound2)
    b2 = jax.random.uniform(k4, (1, action_dim), jnp.float32, -bound2, bound2)
    return w1, b1, w2, b2


def prepare_params(w1, b1, w2, b2, *, weight_dtype=jnp.float32):
    """One-time parameter prep, hoisted out of the forward path.

    Weights stay (in, out); biases become (1, out) rows (2-D for TPU layout).
    Optionally cast the weights to bf16 to halve their HBM/VMEM footprint; the
    biases stay f32 so bias-add / ReLU remain full precision (the matmuls
    accumulate in f32 regardless via preferred_element_type).
    """
    w1 = jnp.asarray(w1, weight_dtype)
    w2 = jnp.asarray(w2, weight_dtype)
    b1 = jnp.asarray(b1, jnp.float32).reshape(1, -1)
    b2 = jnp.asarray(b2, jnp.float32).reshape(1, -1)
    return w1, b1, w2, b2


def simple_qnet_forward(state, params, *, batch_tile=8192):
    """Forward pass equivalent to: relu(state @ w1 + b1) @ w2 + b2.

    state:  (B, state_dim)   f32 (or bf16)
    params: output of prepare_params(...)
    """
    w1, b1, w2, b2 = params
    B, S = state.shape
    H = w1.shape[1]
    A = w2.shape[1]

    if batch_tile % 8 != 0:
        raise ValueError(f"batch_tile must be a multiple of 8 (got {batch_tile})")

    x_bytes = state.size * state.dtype.itemsize
    param_bytes = ((w1.size + w2.size) * w1.dtype.itemsize
                   + (b1.size + b2.size) * b1.dtype.itemsize)
    out_bytes = B * A * 4
    flops = 2 * B * S * H + 2 * B * H * A

    if B <= batch_tile:
        # Single block: everything VMEM-resident, no grid, no pipelining
        # machinery.  This path is launch/DMA-latency bound; the CostEstimate
        # lets XLA schedule surrounding work around it.
        return pl.pallas_call(
            _qnet_kernel,
            out_shape=jax.ShapeDtypeStruct((B, A), jnp.float32),
            in_specs=[pl.BlockSpec(memory_space=pltpu.MemorySpace.VMEM)] * 5,
            out_specs=pl.BlockSpec(memory_space=pltpu.MemorySpace.VMEM),
            cost_estimate=pl.CostEstimate(
                flops=flops,
                transcendentals=0,
                bytes_accessed=x_bytes + param_bytes + out_bytes,
            ),
        )(state, w1, b1, w2, b2)

    # Large batch: tile only the batch dim.  Weights/biases use a constant
    # index_map so they stay VMEM-resident across grid steps; x/out blocks are
    # unpadded (S and A are the full last dims, TB is a multiple of 8).  The
    # ragged last tile (B % TB != 0) is handled by Pallas' masked boundary
    # writes -- no padded copy of the activations is materialized.
    TB = batch_tile
    grid = (pl.cdiv(B, TB),)

    x_tile_bytes = TB * S * state.dtype.itemsize
    out_tile_bytes = TB * A * 4
    # Generous bound: triple-counted tiles (double buffer + live compute) plus
    # resident params, floored at 16 MiB and capped at 64 MiB so the same
    # setting is valid on v7x's smaller physical VMEM.
    vmem_limit = 3 * (x_tile_bytes + out_tile_bytes) + 2 * param_bytes + (2 << 20)
    vmem_limit = min(max(vmem_limit, 16 << 20), 64 << 20)

    # TODO(synk): on v7x, verify in a trace that both TensorCores receive batch
    # tiles with "parallel"; if not, switch this axis to pltpu.CORE_PARALLEL.
    return pl.pallas_call(
        _qnet_kernel,
        out_shape=jax.ShapeDtypeStruct((B, A), jnp.float32),
        grid=grid,
        in_specs=[
            pl.BlockSpec((TB, S), lambda i: (i, 0)),   # x: new batch tile per step
            pl.BlockSpec((S, H), lambda i: (0, 0)),    # w1: resident
            pl.BlockSpec((1, H), lambda i: (0, 0)),    # b1: resident
            pl.BlockSpec((H, A), lambda i: (0, 0)),    # w2: resident
            pl.BlockSpec((1, A), lambda i: (0, 0)),    # b2: resident
        ],
        out_specs=pl.BlockSpec((TB, A), lambda i: (i, 0)),
        compiler_params=pltpu.CompilerParams(
            dimension_semantics=("parallel",),
            vmem_limit_bytes=vmem_limit,
        ),
        cost_estimate=pl.CostEstimate(
            flops=flops,
            transcendentals=0,
            bytes_accessed=x_bytes + param_bytes + out_bytes,
        ),
    )(state, w1, b1, w2, b2)


def _ref_forward(state, w1, b1, w2, b2):
    return jnp.maximum(state @ w1 + b1, 0.0) @ w2 + b2


if __name__ == "__main__":
    # TODO(synk): SimpleQNet.get_loss builds an external LOSSES-registry module;
    # only the forward pass is implemented here.
    state_dim, hidden_dim, action_dim = 16, 32, 8
    batch = 8

    key = jax.random.PRNGKey(0)
    k_params, k_state = jax.random.split(key)
    w1, b1, w2, b2 = init_params(k_params, state_dim, hidden_dim, action_dim)
    params = prepare_params(w1, b1, w2, b2)  # one-time prep, not per forward

    state = jax.random.normal(k_state, (batch, state_dim), jnp.float32)

    # Small-batch (no-grid) path.
    out = jax.block_until_ready(simple_qnet_forward(state, params))
    ref = _ref_forward(state, w1, b1, w2, b2)
    assert out.shape == (batch, action_dim)
    assert jnp.allclose(out, ref, atol=1e-5, rtol=1e-5)

    # Tiled (grid over batch) path with a ragged last tile, forced small tile.
    big_batch = 20
    state_big = jax.random.normal(jax.random.PRNGKey(1), (big_batch, state_dim), jnp.float32)
    out_big = jax.block_until_ready(simple_qnet_forward(state_big, params, batch_tile=8))
    ref_big = _ref_forward(state_big, w1, b1, w2, b2)
    assert out_big.shape == (big_batch, action_dim)
    assert jnp.allclose(out_big, ref_big, atol=1e-5, rtol=1e-5)

    # bf16-weight variant of the tiled path (halves weight HBM/VMEM traffic;
    # accumulation / bias / ReLU stay f32).
    params_bf16 = prepare_params(w1, b1, w2, b2, weight_dtype=jnp.bfloat16)
    out_bf16 = jax.block_until_ready(
        simple_qnet_forward(state_big, params_bf16, batch_tile=8))
    assert out_bf16.shape == (big_batch, action_dim)
    assert jnp.allclose(out_bf16, ref_big, atol=5e-2, rtol=5e-2)

    print("KERNEL_OK")
</pallas_src>

<mosaic_0001>
module attributes {stable_mosaic.version = 11 : i64} {
  func.func @_qnet_kernel(%arg0: memref<8x16xf32, #tpu.memory_space<vmem>>, %arg1: memref<16x32xf32, #tpu.memory_space<vmem>>, %arg2: memref<1x32xf32, #tpu.memory_space<vmem>>, %arg3: memref<32x8xf32, #tpu.memory_space<vmem>>, %arg4: memref<1x8xf32, #tpu.memory_space<vmem>>, %arg5: memref<8x8xf32, #tpu.memory_space<vmem>>) attributes {dimension_semantics = [], scalar_prefetch = 0 : i64, scratch_operands = 0 : i64, tpu.core_type = #tpu.core_type<tc>} {
    %c0 = arith.constant 0 : index
    %c0_0 = arith.constant 0 : index
    %0 = vector.load %arg0[%c0, %c0_0] : memref<8x16xf32, #tpu.memory_space<vmem>>, vector<8x16xf32>
    %c0_1 = arith.constant 0 : index
    %c0_2 = arith.constant 0 : index
    %1 = vector.load %arg1[%c0_1, %c0_2] : memref<16x32xf32, #tpu.memory_space<vmem>>, vector<16x32xf32>
    %cst = arith.constant dense<0.000000e+00> : vector<8x32xf32>
    %2 = tpu.matmul %0, %1, %cst {dimension_numbers = #tpu.dot_dimension_numbers<[1], [0], [0], [1], [0, 0, 1, 1], [], []>} : vector<8x16xf32>, vector<16x32xf32>, vector<8x32xf32> -> vector<8x32xf32>
    %c0_3 = arith.constant 0 : index
    %c0_4 = arith.constant 0 : index
    %3 = vector.load %arg2[%c0_3, %c0_4] : memref<1x32xf32, #tpu.memory_space<vmem>>, vector<1x32xf32>
    %4 = vector.broadcast %3 : vector<1x32xf32> to vector<8x32xf32>
    %5 = arith.addf %2, %4 : vector<8x32xf32>
    %cst_5 = arith.constant 0.000000e+00 : f32
    %6 = vector.broadcast %cst_5 : f32 to vector<8x32xf32>
    %7 = arith.maximumf %5, %6 : vector<8x32xf32>
    %c0_6 = arith.constant 0 : index
    %c0_7 = arith.constant 0 : index
    %8 = vector.load %arg3[%c0_6, %c0_7] : memref<32x8xf32, #tpu.memory_space<vmem>>, vector<32x8xf32>
    %cst_8 = arith.constant dense<0.000000e+00> : vector<8x8xf32>
    %9 = tpu.matmul %7, %8, %cst_8 {dimension_numbers = #tpu.dot_dimension_numbers<[1], [0], [0], [1], [0, 0, 1, 1], [], []>} : vector<8x32xf32>, vector<32x8xf32>, vector<8x8xf32> -> vector<8x8xf32>
    %c0_9 = arith.constant 0 : index
    %c0_10 = arith.constant 0 : index
    %10 = vector.load %arg4[%c0_9, %c0_10] : memref<1x8xf32, #tpu.memory_space<vmem>>, vector<1x8xf32>
    %11 = vector.broadcast %10 : vector<1x8xf32> to vector<8x8xf32>
    %12 = arith.addf %9, %11 : vector<8x8xf32>
    %c0_11 = arith.constant 0 : index
    %c0_12 = arith.constant 0 : index
    %13 = vector.load %arg5[%c0_11, %c0_12] : memref<8x8xf32, #tpu.memory_space<vmem>>, vector<8x8xf32>
    tpu.vector_store %arg5[%c0_11, %c0_12], %12 {strides = array<i32>} : memref<8x8xf32, #tpu.memory_space<vmem>>, vector<8x8xf32>,
    return
  }
}

</mosaic_0001>

<llo_original>
// kernel: tpu_custom_call.1
$region0: #{tpu_custom_call.1}
  #allocation0 [shape = 'u32[]', space=smem, size = 0x4, offset = 0x4, fixed_abs, tag = 'smem constant byte address 0x4 - core index']
  #allocation1 [shape = 'u32[144,128]{1,0:T(1,128)}', space=vmem, size = 0x12000, scoped, tag = 'internal scratch']
  %s0 = inlined_call_operand.vmem [shape: f32[8,16], index: 0, kind: input, shape index: {}]
  %s1 = inlined_call_operand.vmem [shape: f32[16,32], index: 1, kind: input, shape index: {}]
  %s2 = inlined_call_operand.vmem [shape: f32[1,32], index: 2, kind: input, shape index: {}]
  %s3 = inlined_call_operand.vmem [shape: f32[32,8], index: 3, kind: input, shape index: {}]
  %s4 = inlined_call_operand.vmem [shape: f32[1,8], index: 4, kind: input, shape index: {}]
  %s5 = inlined_call_operand.hbm [shape: f32[8,8], index: 5, kind: output, shape index: {}]
  %s6 = sld [smem:[#allocation0]]
  $region30: #{tpu_custom_call.1} parent=0
    _
  %s8 = ssub.s32 1, %s6
  %s9 = scalar_select 0, %s8, %s6
  $region1: #{tpu_custom_call.1} parent=0
    #allocation2 [shape = 'u8[4096]{0}', space=vmem, size = 0x1000, scoped, tag = 'output window, operand 0, single buffered']
    #allocation3 [shape = 's32[1]{0}', space=sflag, size = 0x4, scoped, tag = 'scoped memory for tpu_custom_call.1']
    %10 = vsyncpa [#allocation3], 0
    // Predicated region
    $region2: #{tpu_custom_call.1} parent=1 // pred_check
      _
    $region3: #{tpu_custom_call.1} parent=1 // pred_check_branch
      %12 = sbr.rel (0) target = $region5
    $region4: #{tpu_custom_call.1} parent=1 // pred_region
      _
    $region5: #{tpu_custom_call.1} parent=1 // pred_fallthru
      _
    // Predicated region
    $region6: #{tpu_custom_call.1} parent=1 // pred_check
      _
    $region7: #{tpu_custom_call.1} parent=1 // pred_check_branch
      %14 = sbr.rel (0) target = $region9
    $region8: #{tpu_custom_call.1} parent=1 // pred_region
      _
    $region9: #{tpu_custom_call.1} parent=1 // pred_fallthru
      _
    // Predicated region
    $region10: #{tpu_custom_call.1} parent=1 // pred_check
      _
    $region11: #{tpu_custom_call.1} parent=1 // pred_check_branch
      %16 = sbr.rel (0) target = $region13
    $region12: #{tpu_custom_call.1} parent=1 // pred_region
      _
    $region13: #{tpu_custom_call.1} parent=1 // pred_fallthru
      _
    // Predicated region
    $region14: #{tpu_custom_call.1} parent=1 // pred_check
      _
    $region15: #{tpu_custom_call.1} parent=1 // pred_check_branch
      %18 = sbr.rel (0) target = $region17
    $region16: #{tpu_custom_call.1} parent=1 // pred_region
      _
    $region17: #{tpu_custom_call.1} parent=1 // pred_fallthru
      _
    // Predicated region
    $region18: #{tpu_custom_call.1} parent=1 // pred_check
      _
    $region19: #{tpu_custom_call.1} parent=1 // pred_check_branch
      %20 = sbr.rel (0) target = $region21
    $region20: #{tpu_custom_call.1} parent=1 // pred_region
      _
    $region21: #{tpu_custom_call.1} parent=1 // pred_fallthru
      _
    %v21 = vld [vmem:[%s0] sm:$0xff]
    %v22 = vld [vmem:[%s1] sm:$0xff]
    %v23 = vld [vmem:[%s1 + $0x8] sm:$0xff]
    %v24 = vld [vmem:[%s2] sm:$0x1]
    %v26 = vlaneseq
    %v27 = vshrl.u32 %v26, 7
    %v28 = vsub.s32 0, %v27
    %v29 = vrot.slane %v24, %v28
    %vm31 = vcmask 130048
    %v33 = vsel %vm31, %v21, 0
    %35 = vmatprep.subr.mxu0 0.0
    %36 = vmatpush1.msra.mxu0 %v22
    %37 = vmatprep.subr.mxu0 0.0
    %38 = vmatpush1.msra.mxu0 %v23
    %39 = vmatprep.subr.mxu0 0.0
    %40 = vmatpush1.msra.mxu0 0.0
    %41 = vmatprep.subr.mxu0 0.0
    %42 = vmatpush1.msra.mxu0 0.0
    %43 = vmatprep.subr.mxu0 0.0
    %44 = vmatpush1.msra.mxu0 0.0
    %45 = vmatprep.subr.mxu0 0.0
    %46 = vmatpush1.msra.mxu0 0.0
    %47 = vmatprep.subr.mxu0 0.0
    %48 = vmatpush1.msra.mxu0 0.0
    %49 = vmatprep.subr.mxu0 0.0
    %50 = vmatpush1.msra.mxu0 0.0
    %51 = vmatprep.subr.mxu0 0.0
    %52 = vmatpush1.msra.mxu0 0.0
    %53 = vmatprep.subr.mxu0 0.0
    %54 = vmatpush1.msra.mxu0 0.0
    %55 = vmatprep.subr.mxu0 0.0
    %56 = vmatpush1.msra.mxu0 0.0
    %57 = vmatprep.subr.mxu0 0.0
    %58 = vmatpush1.msra.mxu0 0.0
    %59 = vmatprep.subr.mxu0 0.0
    %60 = vmatpush1.msra.mxu0 0.0
    %61 = vmatprep.subr.mxu0 0.0
    %62 = vmatpush1.msra.mxu0 0.0
    %63 = vmatprep.subr.mxu0 0.0
    %64 = vmatpush1.msra.mxu0 0.0
    %65 = vmatprep.subr.mxu0 0.0
    %66 = vmatpush1.msra.mxu0 0.0
    %67 = vmatprep.subr.mxu0 0.0
    %68 = vmatpush1.msra.mxu0 0.0
    %69 = vmatprep.subr.mxu0 0.0
    %70 = vmatpush1.msra.mxu0 0.0
    %71 = vmatprep.subr.mxu0 0.0
    %72 = vmatpush1.msra.mxu0 0.0
    %73 = vmatprep.subr.mxu0 0.0
    %74 = vmatpush1.msra.mxu0 0.0
    %75 = vmatprep.subr.mxu0 0.0
    %76 = vmatpush1.msra.mxu0 0.0
    %77 = vmatprep.subr.mxu0 0.0
    %78 = vmatpush1.msra.mxu0 0.0
    %79 = vmatprep.subr.mxu0 0.0
    %80 = vmatpush1.msra.mxu0 0.0
    %81 = vmatprep.subr.mxu0 0.0
    %82 = vmatpush1.msra.mxu0 0.0
    %83 = vmatprep.subr.mxu0 0.0
    %84 = vmatpush1.msra.mxu0 0.0
    %85 = vmatprep.subr.mxu0 0.0
    %86 = vmatpush1.msra.mxu0 0.0
    %87 = vmatprep.subr.mxu0 0.0
    %88 = vmatpush1.msra.mxu0 0.0
    %89 = vmatprep.subr.mxu0 0.0
    %90 = vmatpush1.msra.mxu0 0.0
    %91 = vmatprep.subr.mxu0 0.0
    %92 = vmatpush1.msra.mxu0 0.0
    %93 = vmatprep.subr.mxu0 0.0
    %94 = vmatpush1.msra.mxu0 0.0
    %95 = vmatprep.subr.mxu0 0.0
    %96 = vmatpush1.msra.mxu0 0.0
    %97 = vmatprep.subr.mxu0 0.0
    %98 = vmatpush1.msra.mxu0 0.0
    %99 = vmatprep.mubr.f32.mxu0 0.0
    %100 = vmatmul.mubr.f32.gmra.mrb[0].mxu0 %v33
    %v101 = vpop.f32.mrb[0].mxu0
    %v102 = vadd.f32 %v29, %v101
    %v103 = vpop.f32.mrb[0].mxu0
    %104 = vdwg.mxu0
    %v105 = vmax.f32 %v102, 0.0
    %v106 = vld [vmem:[%s3] sm:$0xff]
    %v107 = vld [vmem:[%s3 + $0x8] sm:$0xff]
    %v108 = vld [vmem:[%s3 + $0x10] sm:$0xff]
    %v109 = vld [vmem:[%s3 + $0x18] sm:$0xff]
    %v110 = vld [vmem:[%s4] sm:$0x1]
    %v112 = vlaneseq
    %v113 = vshrl.u32 %v112, 7
    %v114 = vsub.s32 0, %v113
    %v115 = vrot.slane %v110, %v114
    %vm117 = vcmask 261120
    %v119 = vsel %vm117, %v105, 0
    %121 = vmatprep.subr.mxu0 0.0
    %122 = vmatpush1.msra.mxu0 %v106
    %123 = vmatprep.subr.mxu0 0.0
    %124 = vmatpush1.msra.mxu0 %v107
    %125 = vmatprep.subr.mxu0 0.0
    %126 = vmatpush1.msra.mxu0 %v108
    %127 = vmatprep.subr.mxu0 0.0
    %128 = vmatpush1.msra.mxu0 %v109
    %129 = vmatprep.subr.mxu0 0.0
    %130 = vmatpush1.msra.mxu0 0.0
    %131 = vmatprep.subr.mxu0 0.0
    %132 = vmatpush1.msra.mxu0 0.0
    %133 = vmatprep.subr.mxu0 0.0
    %134 = vmatpush1.msra.mxu0 0.0
    %135 = vmatprep.subr.mxu0 0.0
    %136 = vmatpush1.msra.mxu0 0.0
    %137 = vmatprep.subr.mxu0 0.0
    %138 = vmatpush1.msra.mxu0 0.0
    %139 = vmatprep.subr.mxu0 0.0
    %140 = vmatpush1.msra.mxu0 0.0
    %141 = vmatprep.subr.mxu0 0.0
    %142 = vmatpush1.msra.mxu0 0.0
    %143 = vmatprep.subr.mxu0 0.0
    %144 = vmatpush1.msra.mxu0 0.0
    %145 = vmatprep.subr.mxu0 0.0
    %146 = vmatpush1.msra.mxu0 0.0
    %147 = vmatprep.subr.mxu0 0.0
    %148 = vmatpush1.msra.mxu0 0.0
    %149 = vmatprep.subr.mxu0 0.0
    %150 = vmatpush1.msra.mxu0 0.0
    %151 = vmatprep.subr.mxu0 0.0
    %152 = vmatpush1.msra.mxu0 0.0
    %153 = vmatprep.subr.mxu0 0.0
    %154 = vmatpush1.msra.mxu0 0.0
    %155 = vmatprep.subr.mxu0 0.0
    %156 = vmatpush1.msra.mxu0 0.0
    %157 = vmatprep.subr.mxu0 0.0
    %158 = vmatpush1.msra.mxu0 0.0
    %159 = vmatprep.subr.mxu0 0.0
    %160 = vmatpush1.msra.mxu0 0.0
    %161 = vmatprep.subr.mxu0 0.0
    %162 = vmatpush1.msra.mxu0 0.0
    %163 = vmatprep.subr.mxu0 0.0
    %164 = vmatpush1.msra.mxu0 0.0
    %165 = vmatprep.subr.mxu0 0.0
    %166 = vmatpush1.msra.mxu0 0.0
    %167 = vmatprep.subr.mxu0 0.0
    %168 = vmatpush1.msra.mxu0 0.0
    %169 = vmatprep.subr.mxu0 0.0
    %170 = vmatpush1.msra.mxu0 0.0
    %171 = vmatprep.subr.mxu0 0.0
    %172 = vmatpush1.msra.mxu0 0.0
    %173 = vmatprep.subr.mxu0 0.0
    %174 = vmatpush1.msra.mxu0 0.0
    %175 = vmatprep.subr.mxu0 0.0
    %176 = vmatpush1.msra.mxu0 0.0
    %177 = vmatprep.subr.mxu0 0.0
    %178 = vmatpush1.msra.mxu0 0.0
    %179 = vmatprep.subr.mxu0 0.0
    %180 = vmatpush1.msra.mxu0 0.0
    %181 = vmatprep.subr.mxu0 0.0
    %182 = vmatpush1.msra.mxu0 0.0
    %183 = vmatprep.subr.mxu0 0.0
    %184 = vmatpush1.msra.mxu0 0.0
    %185 = vmatprep.mubr.f32.mxu0 0.0
    %186 = vmatmul.mubr.f32.gmra.mrb[0].mxu0 %v119
    %v187 = vpop.f32.mrb[0].mxu0
    %v188 = vadd.f32 %v115, %v187
    %v189 = vpop.f32.mrb[0].mxu0
    %190 = vdwg.mxu0
    %vm191 = vcmask 64512
    %192 = vst.msk [vmem:[#allocation2] sm:$0xff] %vm191, %v188
    // Predicated region
    $region22: #{tpu_custom_call.1} parent=1 // pred_check
      _
    $region23: #{tpu_custom_call.1} parent=1 // pred_check_branch
      %194 = sbr.rel (0) target = $region25
    $region24: #{tpu_custom_call.1} parent=1 // pred_region
      %s196 = ssub.s32 128, 128
      %197 = vsyncadd [#allocation3], %s196
      %s199 = sshll.u32 [#allocation2], 4
      %s200 = int_to_ptr.vmem [resolvable:$true] %s199
      %202 = dma.vmem_to_hbm [thread:$0]  %s200, 128, %s5, [#allocation3]
    $region25: #{tpu_custom_call.1} parent=1 // pred_fallthru
      _
    // Predicated region
    $region26: #{tpu_custom_call.1} parent=1 // pred_check
      _
    $region27: #{tpu_custom_call.1} parent=1 // pred_check_branch
      %204 = sbr.rel (0) target = $region29
    $region28: #{tpu_custom_call.1} parent=1 // pred_region
      %205 = dma.done [#allocation3], 128
    $region29: #{tpu_custom_call.1} parent=1 // pred_fallthru
      _
    %206 = vsyncpa [#allocation3], 1

</llo_original>
